<compile_context>
chip_gen: v6e
topology: v6e:2x2x1
jax: 0.10.0
libtpu: 0.0.40
codegen_flags: <defaults>
</compile_context>

<pallas_src>
import math
from functools import partial

import jax
import jax.numpy as jnp
from jax import lax
from jax.experimental import pallas as pl
from jax.experimental.pallas import tpu as pltpu


# ---------------------------------------------------------------------------
# Fused kernel: scores -> in-kernel top-k -> one-hot MXU pooling
# ---------------------------------------------------------------------------
def _gpool_fused_kernel(h_ref, w_ref, a_ref, b_ref, ph_ref, pa_ref, idx_ref):
    # h: [N, F], w: [1, F] (F on lanes), a: [N, N], b: [1, 1] in SMEM
    n, _ = h_ref.shape
    k = ph_ref.shape[0]

    # --- stage 1: raw logits z = H @ w + b (VPU multiply + XLU lane reduce) --
    # Rank on logits; sigmoid (monotone) is applied only to the K kept values.
    h_f32 = h_ref[...].astype(jnp.float32)
    w_f32 = w_ref[...].astype(jnp.float32)
    z = jnp.sum(h_f32 * w_f32, axis=-1, keepdims=True) + b_ref[0, 0]   # [N, 1]

    # --- stage 2: in-kernel top-k (K static & tiny -> unrolled argmax+mask) --
    row_n = lax.broadcasted_iota(jnp.int32, (n, 1), 0)   # node ids
    row_k = lax.broadcasted_iota(jnp.int32, (k, 1), 0)   # output-row ids
    col_k = lax.broadcasted_iota(jnp.int32, (1, k), 1)   # lane-dense idx slots

    zz = z
    idx_col = jnp.zeros((k, 1), jnp.int32)               # selected node per row
    val_col = jnp.zeros((k, 1), jnp.float32)             # selected logit per row
    idx_row = jnp.zeros((1, k), jnp.int32)               # lane-dense idx output
    for step in range(k):
        m = jnp.max(zz)                                  # current max logit
        # first (lowest-index) node attaining the max -> matches lax.top_k
        i_sel = jnp.min(jnp.where(zz == m, row_n, jnp.int32(n)))
        idx_col = jnp.where(row_k == step, i_sel, idx_col)
        val_col = jnp.where(row_k == step, m, val_col)
        idx_row = jnp.where(col_k == step, i_sel, idx_row)
        zz = jnp.where(row_n == i_sel, -jnp.inf, zz)     # mask out selected

    # --- stage 3: pooling via one-hot selection matmuls on the MXU ----------
    col_n = lax.broadcasted_iota(jnp.int32, (k, n), 1)
    sel = col_n == idx_col                                # [K, N] one-hot (bool)

    # sigmoid only on the K kept logits (exact f32; exp overflow -> 0, no NaN)
    values = 1.0 / (1.0 + jnp.exp(-val_col))              # [K, 1]

    # pooled_H = H[idx] * values  (operands stay in their native dtype)
    ph = jnp.dot(sel.astype(h_ref.dtype), h_ref[...],
                 preferred_element_type=jnp.float32)      # [K, F] = H[idx]
    ph_ref[...] = (ph * values).astype(ph_ref.dtype)

    # pooled_A = P @ A @ P^T = A[idx][:, idx]
    pa_rows = jnp.dot(sel.astype(a_ref.dtype), a_ref[...],
                      preferred_element_type=jnp.float32)  # [K, N] = A[idx, :]
    pa = lax.dot_general(pa_rows, sel.astype(pa_rows.dtype),
                         (((1,), (1,)), ((), ())),
                         preferred_element_type=jnp.float32)  # [K, K]
    pa_ref[...] = pa.astype(pa_ref.dtype)

    idx_ref[...] = idx_row                                 # lane-dense (1, K)


# ---------------------------------------------------------------------------
# Wrapper
# ---------------------------------------------------------------------------
@partial(jax.jit, static_argnames=("pooling_size",))
def gpool(H, A, w, b, *, pooling_size):
    """GPool forward: returns (pooled_H, pooled_A, idx).

    H: [N, F]  node features
    A: [N, N]  adjacency
    w: [F]     projection weight (nn.Linear(F, 1).weight flattened)
    b: []      projection bias
    """
    N, F = H.shape
    K = pooling_size
    assert A.shape == (N, N)

    vmem = pl.BlockSpec(memory_space=pltpu.MemorySpace.VMEM)
    smem = pl.BlockSpec(memory_space=pltpu.MemorySpace.SMEM)

    pooled_H, pooled_A, idx2d = pl.pallas_call(
        _gpool_fused_kernel,
        out_shape=(jax.ShapeDtypeStruct((K, F), H.dtype),
                   jax.ShapeDtypeStruct((K, K), A.dtype),
                   jax.ShapeDtypeStruct((1, K), jnp.int32)),
        in_specs=[vmem, vmem, vmem, smem],
        out_specs=(vmem, vmem, vmem),
        cost_estimate=pl.CostEstimate(
            flops=(2 * N * F              # projection
                   + 4 * K * N            # top-k max/select/mask passes
                   + 2 * K * N * F        # P @ H
                   + 2 * K * N * N        # P @ A
                   + 2 * K * K * N        # (P A) @ P^T
                   + K * F),              # value scaling
            transcendentals=K,
            bytes_accessed=4 * (N * F + F + 1 + N * N + K * F + K * K + K)),
    )(H, w.reshape(1, F), A, b.reshape(1, 1).astype(jnp.float32))

    return pooled_H, pooled_A, idx2d.reshape(K)


if __name__ == "__main__":
    # Small shapes consistent with the module: N=8 nodes, in_features=32, K=4.
    N, F_IN, K = 8, 32, 4
    key = jax.random.PRNGKey(0)
    k_h, k_a, k_w, k_b = jax.random.split(key, 4)

    H = jax.random.normal(k_h, (N, F_IN), dtype=jnp.float32)
    A_raw = jax.random.uniform(k_a, (N, N), dtype=jnp.float32)
    A = (A_raw + A_raw.T) * 0.5 + jnp.eye(N, dtype=jnp.float32)

    # nn.Linear(in_features, 1) default init bound: 1/sqrt(fan_in).
    bound = 1.0 / math.sqrt(F_IN)
    w = jax.random.uniform(k_w, (F_IN,), dtype=jnp.float32,
                           minval=-bound, maxval=bound)
    b = jax.random.uniform(k_b, (), dtype=jnp.float32,
                           minval=-bound, maxval=bound)

    # drop_prob = 0 -> Dropout is Identity.
    # TODO(synk): training-mode dropout (drop_prob > 0) not implemented.
    pooled_H, pooled_A, idx = gpool(H, A, w, b, pooling_size=K)
    jax.block_until_ready((pooled_H, pooled_A, idx))

    # Pure-JAX reference.
    scores_ref = jax.nn.sigmoid(
        jnp.einsum("nf,f->n", H, w, precision=lax.Precision.HIGHEST) + b)
    vals_ref, idx_ref = lax.top_k(scores_ref, K)
    pooled_H_ref = H[idx_ref, :] * vals_ref[:, None]
    pooled_A_ref = A[idx_ref, :][:, idx_ref]

    assert pooled_H.shape == (K, F_IN)
    assert pooled_A.shape == (K, K)
    assert idx.shape == (K,)
    assert jnp.array_equal(idx, idx_ref), "top-k indices mismatch vs reference"
    assert jnp.allclose(pooled_H, pooled_H_ref, atol=1e-5, rtol=1e-5), \
        "pooled_H mismatch vs reference"
    assert jnp.allclose(pooled_A, pooled_A_ref, atol=1e-5, rtol=1e-5), \
        "pooled_A mismatch vs reference"

    print("KERNEL_OK")
</pallas_src>

<mosaic_0001>
module attributes {stable_mosaic.version = 11 : i64} {
  func.func @_gpool_fused_kernel(%arg0: memref<8x32xf32, #tpu.memory_space<vmem>>, %arg1: memref<1x32xf32, #tpu.memory_space<vmem>>, %arg2: memref<8x8xf32, #tpu.memory_space<vmem>>, %arg3: memref<1x1xf32, #tpu.memory_space<smem>>, %arg4: memref<4x32xf32, #tpu.memory_space<vmem>>, %arg5: memref<4x4xf32, #tpu.memory_space<vmem>>, %arg6: memref<1x4xi32, #tpu.memory_space<vmem>>) attributes {dimension_semantics = [], scalar_prefetch = 0 : i64, scratch_operands = 0 : i64, tpu.core_type = #tpu.core_type<tc>} {
    %c0 = arith.constant 0 : index
    %c0_0 = arith.constant 0 : index
    %0 = vector.load %arg0[%c0, %c0_0] : memref<8x32xf32, #tpu.memory_space<vmem>>, vector<8x32xf32>
    %c0_1 = arith.constant 0 : index
    %c0_2 = arith.constant 0 : index
    %1 = vector.load %arg1[%c0_1, %c0_2] : memref<1x32xf32, #tpu.memory_space<vmem>>, vector<1x32xf32>
    %2 = vector.broadcast %1 : vector<1x32xf32> to vector<8x32xf32>
    %3 = arith.mulf %0, %2 : vector<8x32xf32>
    %cst = arith.constant dense<0.000000e+00> : vector<8xf32>
    %4 = vector.multi_reduction <add>, %3, %cst [1] : vector<8x32xf32> to vector<8xf32>
    %5 = vector.shape_cast %4 : vector<8xf32> to vector<8x1xf32>
    %c0_3 = arith.constant 0 : index
    %c0_4 = arith.constant 0 : index
    %6 = memref.load %arg3[%c0_3, %c0_4] : memref<1x1xf32, #tpu.memory_space<smem>>
    %7 = vector.broadcast %6 : f32 to vector<8x1xf32>
    %8 = arith.addf %5, %7 : vector<8x1xf32>
    %9 = tpu.iota {dimensions = array<i32: 0>} : vector<8x1xi32>
    %10 = tpu.iota {dimensions = array<i32: 0>} : vector<4x1xi32>
    %11 = tpu.iota {dimensions = array<i32: 1>} : vector<1x4xi32>
    %c0_i32 = arith.constant 0 : i32
    %12 = vector.broadcast %c0_i32 : i32 to vector<4x1xi32>
    %cst_5 = arith.constant 0.000000e+00 : f32
    %13 = vector.broadcast %cst_5 : f32 to vector<4x1xf32>
    %c0_i32_6 = arith.constant 0 : i32
    %14 = vector.broadcast %c0_i32_6 : i32 to vector<1x4xi32>
    %15 = vector.shape_cast %8 : vector<8x1xf32> to vector<1x8x1xf32>
    %cst_7 = arith.constant dense<0xFF800000> : vector<1xf32>
    %16 = vector.multi_reduction <maximumf>, %15, %cst_7 [1, 2] : vector<1x8x1xf32> to vector<1xf32>
    %17 = vector.shape_cast %16 : vector<1xf32> to vector<1x1x1xf32>
    %18 = vector.extract %17[0, 0, 0] : f32 from vector<1x1x1xf32>
    %19 = vector.broadcast %18 : f32 to vector<8x1xf32>
    %20 = arith.cmpf oeq, %8, %19 : vector<8x1xf32>
    %c8_i32 = arith.constant 8 : i32
    %21 = vector.broadcast %c8_i32 : i32 to vector<8x1xi32>
    %22 = arith.select %20, %9, %21 : vector<8x1xi1>, vector<8x1xi32>
    %23 = vector.shape_cast %22 : vector<8x1xi32> to vector<1x8x1xi32>
    %cst_8 = arith.constant dense<2147483647> : vector<1xi32>
    %24 = vector.multi_reduction <minsi>, %23, %cst_8 [1, 2] : vector<1x8x1xi32> to vector<1xi32>
    %25 = vector.shape_cast %24 : vector<1xi32> to vector<1x1x1xi32>
    %26 = vector.extract %25[0, 0, 0] : i32 from vector<1x1x1xi32>
    %c0_i32_9 = arith.constant 0 : i32
    %27 = vector.broadcast %c0_i32_9 : i32 to vector<4x1xi32>
    %28 = arith.cmpi eq, %10, %27 : vector<4x1xi32>
    %29 = vector.broadcast %26 : i32 to vector<4x1xi32>
    %30 = arith.select %28, %29, %12 : vector<4x1xi1>, vector<4x1xi32>
    %c0_i32_10 = arith.constant 0 : i32
    %31 = vector.broadcast %c0_i32_10 : i32 to vector<4x1xi32>
    %32 = arith.cmpi eq, %10, %31 : vector<4x1xi32>
    %33 = vector.broadcast %18 : f32 to vector<4x1xf32>
    %34 = arith.select %32, %33, %13 : vector<4x1xi1>, vector<4x1xf32>
    %c0_i32_11 = arith.constant 0 : i32
    %35 = vector.broadcast %c0_i32_11 : i32 to vector<1x4xi32>
    %36 = arith.cmpi eq, %11, %35 : vector<1x4xi32>
    %37 = vector.broadcast %26 : i32 to vector<1x4xi32>
    %38 = arith.select %36, %37, %14 : vector<1x4xi1>, vector<1x4xi32>
    %39 = vector.broadcast %26 : i32 to vector<8x1xi32>
    %40 = arith.cmpi eq, %9, %39 : vector<8x1xi32>
    %cst_12 = arith.constant 0xFF800000 : f32
    %41 = vector.broadcast %cst_12 : f32 to vector<8x1xf32>
    %42 = arith.select %40, %41, %8 : vector<8x1xi1>, vector<8x1xf32>
    %43 = vector.shape_cast %42 : vector<8x1xf32> to vector<1x8x1xf32>
    %cst_13 = arith.constant dense<0xFF800000> : vector<1xf32>
    %44 = vector.multi_reduction <maximumf>, %43, %cst_13 [1, 2] : vector<1x8x1xf32> to vector<1xf32>
    %45 = vector.shape_cast %44 : vector<1xf32> to vector<1x1x1xf32>
    %46 = vector.extract %45[0, 0, 0] : f32 from vector<1x1x1xf32>
    %47 = vector.broadcast %46 : f32 to vector<8x1xf32>
    %48 = arith.cmpf oeq, %42, %47 : vector<8x1xf32>
    %c8_i32_14 = arith.constant 8 : i32
    %49 = vector.broadcast %c8_i32_14 : i32 to vector<8x1xi32>
    %50 = arith.select %48, %9, %49 : vector<8x1xi1>, vector<8x1xi32>
    %51 = vector.shape_cast %50 : vector<8x1xi32> to vector<1x8x1xi32>
    %cst_15 = arith.constant dense<2147483647> : vector<1xi32>
    %52 = vector.multi_reduction <minsi>, %51, %cst_15 [1, 2] : vector<1x8x1xi32> to vector<1xi32>
    %53 = vector.shape_cast %52 : vector<1xi32> to vector<1x1x1xi32>
    %54 = vector.extract %53[0, 0, 0] : i32 from vector<1x1x1xi32>
    %c1_i32 = arith.constant 1 : i32
    %55 = vector.broadcast %c1_i32 : i32 to vector<4x1xi32>
    %56 = arith.cmpi eq, %10, %55 : vector<4x1xi32>
    %57 = vector.broadcast %54 : i32 to vector<4x1xi32>
    %58 = arith.select %56, %57, %30 : vector<4x1xi1>, vector<4x1xi32>
    %c1_i32_16 = arith.constant 1 : i32
    %59 = vector.broadcast %c1_i32_16 : i32 to vector<4x1xi32>
    %60 = arith.cmpi eq, %10, %59 : vector<4x1xi32>
    %61 = vector.broadcast %46 : f32 to vector<4x1xf32>
    %62 = arith.select %60, %61, %34 : vector<4x1xi1>, vector<4x1xf32>
    %c1_i32_17 = arith.constant 1 : i32
    %63 = vector.broadcast %c1_i32_17 : i32 to vector<1x4xi32>
    %64 = arith.cmpi eq, %11, %63 : vector<1x4xi32>
    %65 = vector.broadcast %54 : i32 to vector<1x4xi32>
    %66 = arith.select %64, %65, %38 : vector<1x4xi1>, vector<1x4xi32>
    %67 = vector.broadcast %54 : i32 to vector<8x1xi32>
    %68 = arith.cmpi eq, %9, %67 : vector<8x1xi32>
    %cst_18 = arith.constant 0xFF800000 : f32
    %69 = vector.broadcast %cst_18 : f32 to vector<8x1xf32>
    %70 = arith.select %68, %69, %42 : vector<8x1xi1>, vector<8x1xf32>
    %71 = vector.shape_cast %70 : vector<8x1xf32> to vector<1x8x1xf32>
    %cst_19 = arith.constant dense<0xFF800000> : vector<1xf32>
    %72 = vector.multi_reduction <maximumf>, %71, %cst_19 [1, 2] : vector<1x8x1xf32> to vector<1xf32>
    %73 = vector.shape_cast %72 : vector<1xf32> to vector<1x1x1xf32>
    %74 = vector.extract %73[0, 0, 0] : f32 from vector<1x1x1xf32>
    %75 = vector.broadcast %74 : f32 to vector<8x1xf32>
    %76 = arith.cmpf oeq, %70, %75 : vector<8x1xf32>
    %c8_i32_20 = arith.constant 8 : i32
    %77 = vector.broadcast %c8_i32_20 : i32 to vector<8x1xi32>
    %78 = arith.select %76, %9, %77 : vector<8x1xi1>, vector<8x1xi32>
    %79 = vector.shape_cast %78 : vector<8x1xi32> to vector<1x8x1xi32>
    %cst_21 = arith.constant dense<2147483647> : vector<1xi32>
    %80 = vector.multi_reduction <minsi>, %79, %cst_21 [1, 2] : vector<1x8x1xi32> to vector<1xi32>
    %81 = vector.shape_cast %80 : vector<1xi32> to vector<1x1x1xi32>
    %82 = vector.extract %81[0, 0, 0] : i32 from vector<1x1x1xi32>
    %c2_i32 = arith.constant 2 : i32
    %83 = vector.broadcast %c2_i32 : i32 to vector<4x1xi32>
    %84 = arith.cmpi eq, %10, %83 : vector<4x1xi32>
    %85 = vector.broadcast %82 : i32 to vector<4x1xi32>
    %86 = arith.select %84, %85, %58 : vector<4x1xi1>, vector<4x1xi32>
    %c2_i32_22 = arith.constant 2 : i32
    %87 = vector.broadcast %c2_i32_22 : i32 to vector<4x1xi32>
    %88 = arith.cmpi eq, %10, %87 : vector<4x1xi32>
    %89 = vector.broadcast %74 : f32 to vector<4x1xf32>
    %90 = arith.select %88, %89, %62 : vector<4x1xi1>, vector<4x1xf32>
    %c2_i32_23 = arith.constant 2 : i32
    %91 = vector.broadcast %c2_i32_23 : i32 to vector<1x4xi32>
    %92 = arith.cmpi eq, %11, %91 : vector<1x4xi32>
    %93 = vector.broadcast %82 : i32 to vector<1x4xi32>
    %94 = arith.select %92, %93, %66 : vector<1x4xi1>, vector<1x4xi32>
    %95 = vector.broadcast %82 : i32 to vector<8x1xi32>
    %96 = arith.cmpi eq, %9, %95 : vector<8x1xi32>
    %cst_24 = arith.constant 0xFF800000 : f32
    %97 = vector.broadcast %cst_24 : f32 to vector<8x1xf32>
    %98 = arith.select %96, %97, %70 : vector<8x1xi1>, vector<8x1xf32>
    %99 = vector.shape_cast %98 : vector<8x1xf32> to vector<1x8x1xf32>
    %cst_25 = arith.constant dense<0xFF800000> : vector<1xf32>
    %100 = vector.multi_reduction <maximumf>, %99, %cst_25 [1, 2] : vector<1x8x1xf32> to vector<1xf32>
    %101 = vector.shape_cast %100 : vector<1xf32> to vector<1x1x1xf32>
    %102 = vector.extract %101[0, 0, 0] : f32 from vector<1x1x1xf32>
    %103 = vector.broadcast %102 : f32 to vector<8x1xf32>
    %104 = arith.cmpf oeq, %98, %103 : vector<8x1xf32>
    %c8_i32_26 = arith.constant 8 : i32
    %105 = vector.broadcast %c8_i32_26 : i32 to vector<8x1xi32>
    %106 = arith.select %104, %9, %105 : vector<8x1xi1>, vector<8x1xi32>
    %107 = vector.shape_cast %106 : vector<8x1xi32> to vector<1x8x1xi32>
    %cst_27 = arith.constant dense<2147483647> : vector<1xi32>
    %108 = vector.multi_reduction <minsi>, %107, %cst_27 [1, 2] : vector<1x8x1xi32> to vector<1xi32>
    %109 = vector.shape_cast %108 : vector<1xi32> to vector<1x1x1xi32>
    %110 = vector.extract %109[0, 0, 0] : i32 from vector<1x1x1xi32>
    %c3_i32 = arith.constant 3 : i32
    %111 = vector.broadcast %c3_i32 : i32 to vector<4x1xi32>
    %112 = arith.cmpi eq, %10, %111 : vector<4x1xi32>
    %113 = vector.broadcast %110 : i32 to vector<4x1xi32>
    %114 = arith.select %112, %113, %86 : vector<4x1xi1>, vector<4x1xi32>
    %c3_i32_28 = arith.constant 3 : i32
    %115 = vector.broadcast %c3_i32_28 : i32 to vector<4x1xi32>
    %116 = arith.cmpi eq, %10, %115 : vector<4x1xi32>
    %117 = vector.broadcast %102 : f32 to vector<4x1xf32>
    %118 = arith.select %116, %117, %90 : vector<4x1xi1>, vector<4x1xf32>
    %c3_i32_29 = arith.constant 3 : i32
    %119 = vector.broadcast %c3_i32_29 : i32 to vector<1x4xi32>
    %120 = arith.cmpi eq, %11, %119 : vector<1x4xi32>
    %121 = vector.broadcast %110 : i32 to vector<1x4xi32>
    %122 = arith.select %120, %121, %94 : vector<1x4xi1>, vector<1x4xi32>
    %123 = tpu.iota {dimensions = array<i32: 1>} : vector<4x8xi32>
    %124 = vector.broadcast %114 : vector<4x1xi32> to vector<4x8xi32>
    %125 = arith.cmpi eq, %123, %124 : vector<4x8xi32>
    %cst_30 = arith.constant 0.000000e+00 : f32
    %126 = vector.broadcast %cst_30 : f32 to vector<4x1xf32>
    %127 = arith.subf %126, %118 : vector<4x1xf32>
    %128 = math.exp %127 : vector<4x1xf32>
    %cst_31 = arith.constant 1.000000e+00 : f32
    %129 = vector.broadcast %cst_31 : f32 to vector<4x1xf32>
    %130 = arith.addf %129, %128 : vector<4x1xf32>
    %cst_32 = arith.constant 1.000000e+00 : f32
    %131 = vector.broadcast %cst_32 : f32 to vector<4x1xf32>
    %132 = arith.divf %131, %130 : vector<4x1xf32>
    %133 = arith.extui %125 : vector<4x8xi1> to vector<4x8xi32>
    %134 = arith.sitofp %133 : vector<4x8xi32> to vector<4x8xf32>
    %c0_33 = arith.constant 0 : index
    %c0_34 = arith.constant 0 : index
    %135 = vector.load %arg0[%c0_33, %c0_34] : memref<8x32xf32, #tpu.memory_space<vmem>>, vector<8x32xf32>
    %cst_35 = arith.constant dense<0.000000e+00> : vector<4x32xf32>
    %136 = tpu.matmul %134, %135, %cst_35 {dimension_numbers = #tpu.dot_dimension_numbers<[1], [0], [0], [1], [0, 0, 1, 1], [], []>} : vector<4x8xf32>, vector<8x32xf32>, vector<4x32xf32> -> vector<4x32xf32>
    %137 = vector.broadcast %132 : vector<4x1xf32> to vector<4x32xf32>
    %138 = arith.mulf %136, %137 : vector<4x32xf32>
    %c0_36 = arith.constant 0 : index
    %c0_37 = arith.constant 0 : index
    %139 = vector.load %arg4[%c0_36, %c0_37] : memref<4x32xf32, #tpu.memory_space<vmem>>, vector<4x32xf32>
    tpu.vector_store %arg4[%c0_36, %c0_37], %138 {strides = array<i32>} : memref<4x32xf32, #tpu.memory_space<vmem>>, vector<4x32xf32>,
    %140 = arith.extui %125 : vector<4x8xi1> to vector<4x8xi32>
    %141 = arith.sitofp %140 : vector<4x8xi32> to vector<4x8xf32>
    %c0_38 = arith.constant 0 : index
    %c0_39 = arith.constant 0 : index
    %142 = vector.load %arg2[%c0_38, %c0_39] : memref<8x8xf32, #tpu.memory_space<vmem>>, vector<8x8xf32>
    %cst_40 = arith.constant dense<0.000000e+00> : vector<4x8xf32>
    %143 = tpu.matmul %141, %142, %cst_40 {dimension_numbers = #tpu.dot_dimension_numbers<[1], [0], [0], [1], [0, 0, 1, 1], [], []>} : vector<4x8xf32>, vector<8x8xf32>, vector<4x8xf32> -> vector<4x8xf32>
    %144 = arith.extui %125 : vector<4x8xi1> to vector<4x8xi32>
    %145 = arith.sitofp %144 : vector<4x8xi32> to vector<4x8xf32>
    %cst_41 = arith.constant dense<0.000000e+00> : vector<4x4xf32>
    %146 = tpu.matmul %143, %145, %cst_41 {dimension_numbers = #tpu.dot_dimension_numbers<[1], [1], [0], [0], [0, 0, 1, 0], [], []>} : vector<4x8xf32>, vector<4x8xf32>, vector<4x4xf32> -> vector<4x4xf32>
    %c0_42 = arith.constant 0 : index
    %c0_43 = arith.constant 0 : index
    %147 = vector.load %arg5[%c0_42, %c0_43] : memref<4x4xf32, #tpu.memory_space<vmem>>, vector<4x4xf32>
    tpu.vector_store %arg5[%c0_42, %c0_43], %146 {strides = array<i32>} : memref<4x4xf32, #tpu.memory_space<vmem>>, vector<4x4xf32>,
    %c0_44 = arith.constant 0 : index
    %c0_45 = arith.constant 0 : index
    %148 = vector.load %arg6[%c0_44, %c0_45] : memref<1x4xi32, #tpu.memory_space<vmem>>, vector<1x4xi32>
    tpu.vector_store %arg6[%c0_44, %c0_45], %122 {strides = array<i32>} : memref<1x4xi32, #tpu.memory_space<vmem>>, vector<1x4xi32>,
    return
  }
}

</mosaic_0001>

<llo_original>
// kernel: gpool.1
$region0: #{gpool.1}
  #allocation0 [shape = 'u32[]', space=smem, size = 0x4, offset = 0x4, fixed_abs, tag = 'smem constant byte address 0x4 - core index']
  #allocation1 [shape = 'u32[144,128]{1,0:T(1,128)}', space=vmem, size = 0x12000, scoped, tag = 'internal scratch']
  #allocation2 [shape = 'f32[1,1]{1,0:T(1,128)S(6)}', space=smem, size = 0x200, scoped, tag = 'scoped memory for gpool.1']
  %s0 = inlined_call_operand.hbm [shape: f32[8,32], index: 0, kind: input, shape index: {}]
  %s1 = inlined_call_operand.vmem [shape: f32[1,32], index: 1, kind: input, shape index: {}]
  %s2 = inlined_call_operand.hbm [shape: f32[8,8], index: 2, kind: input, shape index: {}]
  %s3 = inlined_call_operand.<no memory space> [shape: f32[1,1], index: 3, kind: input, shape index: {}]
  %s4 = inlined_call_operand.hbm [shape: f32[4,32], index: 4, kind: output, shape index: {0}]
  %s5 = inlined_call_operand.hbm [shape: f32[4,4], index: 5, kind: output, shape index: {1}]
  %s6 = inlined_call_operand.hbm [shape: s32[1,4], index: 6, kind: output, shape index: {2}]
  %7 = xla_tuple %s4, %s5, %s6
  %s8 = sld [smem:[#allocation0]]
  $region50: #{gpool.1} parent=0
    _
  %s10 = ssub.s32 1, %s8
  %s11 = scalar_select 0, %s10, %s8
  %12 = sst [smem:[#allocation2]] %s3
  $region1: #{gpool.1} parent=0
    #allocation3 [shape = 'u8[4096]{0}', space=vmem, size = 0x1000, scoped, tag = 'input window, operand 0, single buffered']
    #allocation4 [shape = 's32[1]{0}', space=sflag, size = 0x4, scoped, tag = 'scoped memory for gpool.1']
    #allocation5 [shape = 's32[1]{0}', space=sflag, size = 0x4, scoped, tag = 'scoped memory for gpool.1']
    #allocation6 [shape = 'u8[4096]{0}', space=vmem, size = 0x1000, scoped, tag = 'input window, operand 2, single buffered']
    #allocation7 [shape = 's32[1]{0}', space=sflag, size = 0x4, scoped, tag = 'scoped memory for gpool.1']
    #allocation8 [shape = 'u8[2048]{0}', space=vmem, size = 0x800, scoped, tag = 'output window, operand 0, single buffered']
    #allocation9 [shape = 'u8[2048]{0}', space=vmem, size = 0x800, scoped, tag = 'output window, operand 1, single buffered']
    #allocation10 [shape = 's32[1]{0}', space=sflag, size = 0x4, scoped, tag = 'scoped memory for gpool.1']
    #allocation11 [shape = 'u8[512]{0}', space=vmem, size = 0x400, scoped, tag = 'output window, operand 2, single buffered']
    %13 = vsyncpa [#allocation4], 0
    %14 = vsyncpa [#allocation7], 0
    %15 = vsyncpa [#allocation5], 0
    %16 = vsyncpa [#allocation10], 0
    // Predicated region
    $region2: #{gpool.1} parent=1 // pred_check
      _
    $region3: #{gpool.1} parent=1 // pred_check_branch
      %18 = sbr.rel (0) target = $region5
    $region4: #{gpool.1} parent=1 // pred_region
      %s20 = ssub.s32 128, 128
      %21 = vsyncadd [#allocation4], %s20
      %s23 = sshll.u32 [#allocation3], 4
      %s24 = int_to_ptr.vmem [resolvable:$true] %s23
      %26 = dma.hbm_to_vmem [thread:$0]  %s0, 128, %s24, [#allocation4]
    $region5: #{gpool.1} parent=1 // pred_fallthru
      _
    // Predicated region
    $region6: #{gpool.1} parent=1 // pred_check
      _
    $region7: #{gpool.1} parent=1 // pred_check_branch
      %28 = sbr.rel (0) target = $region9
    $region8: #{gpool.1} parent=1 // pred_region
      _
    $region9: #{gpool.1} parent=1 // pred_fallthru
      _
    // Predicated region
    $region10: #{gpool.1} parent=1 // pred_check
      _
    $region11: #{gpool.1} parent=1 // pred_check_branch
      %30 = sbr.rel (0) target = $region13
    $region12: #{gpool.1} parent=1 // pred_region
      %s32 = ssub.s32 128, 128
      %33 = vsyncadd [#allocation7], %s32
      %s35 = sshll.u32 [#allocation6], 4
      %s36 = int_to_ptr.vmem [resolvable:$true] %s35
      %38 = dma.hbm_to_vmem [thread:$0]  %s2, 128, %s36, [#allocation7]
    $region13: #{gpool.1} parent=1 // pred_fallthru
      _
    // Predicated region
    $region14: #{gpool.1} parent=1 // pred_check
      _
    $region15: #{gpool.1} parent=1 // pred_check_branch
      %40 = sbr.rel (0) target = $region17
    $region16: #{gpool.1} parent=1 // pred_region
      _
    $region17: #{gpool.1} parent=1 // pred_fallthru
      _
    // Predicated region
    $region18: #{gpool.1} parent=1 // pred_check
      _
    $region19: #{gpool.1} parent=1 // pred_check_branch
      %42 = sbr.rel (0) target = $region21
    $region20: #{gpool.1} parent=1 // pred_region
      %43 = dma.done [#allocation4], 128
    $region21: #{gpool.1} parent=1 // pred_fallthru
      _
    // Predicated region
    $region22: #{gpool.1} parent=1 // pred_check
      _
    $region23: #{gpool.1} parent=1 // pred_check_branch
      %45 = sbr.rel (0) target = $region25
    $region24: #{gpool.1} parent=1 // pred_region
      %46 = dma.done [#allocation7], 128
    $region25: #{gpool.1} parent=1 // pred_fallthru
      _
    %v47 = vld [vmem:[#allocation3] sm:$0xff]
    %v48 = vld [vmem:[%s1] sm:$0x1]
    %v50 = vlaneseq
    %v51 = vshrl.u32 %v50, 7
    %v52 = vsub.s32 0, %v51
    %v53 = vrot.slane %v48, %v52
    %v55 = vmul.f32 %v47, %v53
    %vm56 = vcmask 261120
    %v57 = vsel %vm56, %v55, 0.0
    %58 = vadd.xlane.f32.xlu0 %v57
    %v59 = vpop.xlane.xlu0 %58
    %s60 = sld [smem:[#allocation2]]
    %v61 = vstv %s60
    %v62 = vadd.f32 %v59, %v61
    %v63 = vlaneseq
    %v64 = vshrl.u32 %v63, 7
    %v65 = vlaneseq
    %v66 = vand.u32 %v65, 127
    %v67 = vrot.slane %v62, 4
    %v68 = vmax.f32 %v62, %v67
    %v69 = vrot.slane %v68, 2
    %v70 = vmax.f32 %v68, %v69
    %v71 = vrot.slane %v70, 1
    %v72 = vmax.f32 %v70, %v71
    %s73 = vtos %v72
    %v74 = vstv %s73
    %vm75 = vcmp.eq.f32.partialorder %v62, %v74
    %v76 = vsel %vm75, %v64, 8
    %v77 = vrot.slane %v76, 4
    %vm78 = vcmp.lt.s32.totalorder %v76, %v77
    %v79 = vsel %vm78, %v76, %v77
    %v80 = vrot.slane %v79, 2
    %vm81 = vcmp.lt.s32.totalorder %v79, %v80
    %v82 = vsel %vm81, %v79, %v80
    %v83 = vrot.slane %v82, 1
    %vm84 = vcmp.lt.s32.totalorder %v82, %v83
    %v85 = vsel %vm84, %v82, %v83
    %s86 = vtos %v85
    %vm87 = vcmp.eq.s32.totalorder %v64, 0
    %v88 = vstv %s86
    %v89 = vsel %vm87, %v88, 0
    %v90 = vsel %vm87, %v74, 0.0
    %vm91 = vcmp.eq.s32.totalorder %v66, 0
    %v92 = vsel %vm91, %v88, 0
    %vm93 = vcmp.eq.s32.totalorder %v64, %v88
    %v94 = vsel %vm93, -inf, %v62
    %v95 = vrot.slane %v94, 4
    %v96 = vmax.f32 %v94, %v95
    %v97 = vrot.slane %v96, 2
    %v98 = vmax.f32 %v96, %v97
    %v99 = vrot.slane %v98, 1
    %v100 = vmax.f32 %v98, %v99
    %s101 = vtos %v100
    %v102 = vstv %s101
    %vm103 = vcmp.eq.f32.partialorder %v94, %v102
    %v104 = vsel %vm103, %v64, 8
    %v105 = vrot.slane %v104, 4
    %vm106 = vcmp.lt.s32.totalorder %v104, %v105
    %v107 = vsel %vm106, %v104, %v105
    %v108 = vrot.slane %v107, 2
    %vm109 = vcmp.lt.s32.totalorder %v107, %v108
    %v110 = vsel %vm109, %v107, %v108
    %v111 = vrot.slane %v110, 1
    %vm112 = vcmp.lt.s32.totalorder %v110, %v111
    %v113 = vsel %vm112, %v110, %v111
    %s114 = vtos %v113
    %vm115 = vcmp.eq.s32.totalorder %v64, 1
    %v116 = vstv %s114
    %v117 = vsel %vm115, %v116, %v89
    %v118 = vsel %vm115, %v102, %v90
    %vm119 = vcmp.eq.s32.totalorder %v66, 1
    %v120 = vsel %vm119, %v116, %v92
    %vm121 = vcmp.eq.s32.totalorder %v64, %v116
    %v122 = vsel %vm121, -inf, %v94
    %v123 = vrot.slane %v122, 4
    %v124 = vmax.f32 %v122, %v123
    %v125 = vrot.slane %v124, 2
    %v126 = vmax.f32 %v124, %v125
    %v127 = vrot.slane %v126, 1
    %v128 = vmax.f32 %v126, %v127
    %s129 = vtos %v128
    %v130 = vstv %s129
    %vm131 = vcmp.eq.f32.partialorder %v122, %v130
    %v132 = vsel %vm131, %v64, 8
    %v133 = vrot.slane %v132, 4
    %vm134 = vcmp.lt.s32.totalorder %v132, %v133
    %v135 = vsel %vm134, %v132, %v133
    %v136 = vrot.slane %v135, 2
    %vm137 = vcmp.lt.s32.totalorder %v135, %v136
    %v138 = vsel %vm137, %v135, %v136
    %v139 = vrot.slane %v138, 1
    %vm140 = vcmp.lt.s32.totalorder %v138, %v139
    %v141 = vsel %vm140, %v138, %v139
    %s142 = vtos %v141
    %vm143 = vcmp.eq.s32.totalorder %v64, 2
    %v144 = vstv %s142
    %v145 = vsel %vm143, %v144, %v117
    %v146 = vsel %vm143, %v130, %v118
    %vm147 = vcmp.eq.s32.totalorder %v66, 2
    %v148 = vsel %vm147, %v144, %v120
    %vm149 = vcmp.eq.s32.totalorder %v64, %v144
    %v150 = vsel %vm149, -inf, %v122
    %v151 = vrot.slane %v150, 4
    %v152 = vmax.f32 %v150, %v151
    %v153 = vrot.slane %v152, 2
    %v154 = vmax.f32 %v152, %v153
    %v155 = vrot.slane %v154, 1
    %v156 = vmax.f32 %v154, %v155
    %s157 = vtos %v156
    %v158 = vstv %s157
    %vm159 = vcmp.eq.f32.partialorder %v150, %v158
    %v160 = vsel %vm159, %v64, 8
    %v161 = vrot.slane %v160, 4
    %vm162 = vcmp.lt.s32.totalorder %v160, %v161
    %v163 = vsel %vm162, %v160, %v161
    %v164 = vrot.slane %v163, 2
    %vm165 = vcmp.lt.s32.totalorder %v163, %v164
    %v166 = vsel %vm165, %v163, %v164
    %v167 = vrot.slane %v166, 1
    %vm168 = vcmp.lt.s32.totalorder %v166, %v167
    %v169 = vsel %vm168, %v166, %v167
    %s170 = vtos %v169
    %vm171 = vcmp.eq.s32.totalorder %v64, 3
    %v172 = vstv %s170
    %v173 = vsel %vm171, %v172, %v145
    %v174 = vsel %vm171, %v158, %v146
    %vm175 = vcmp.eq.s32.totalorder %v66, 3
    %v176 = vsel %vm175, %v172, %v148
    %vm177 = vcmp.eq.s32.totalorder %v66, %v173
    %v178 = vsub.f32 0.0, %v174
    %v179 = vmul.f32 %v178, 1.442695
    %v180 = vpow.pop %v179
    %v181 = vadd.f32 %v180, 1.0
    %v182 = vrcp.pop %v181
    %v183 = vmul.f32 1.0, %v182
    %v184 = vsel %vm177, 1, 0
    %v185 = vcvt.s32.f32 %v184
    %vm186 = vcmask 64512
    %v188 = vsel %vm186, %v185, 0
    %190 = vmatprep.subr.mxu0 0.0
    %191 = vmatpush1.msra.mxu0 0.0
    %192 = vmatprep.subr.mxu0 0.0
    %193 = vmatpush1.msra.mxu0 0.0
    %194 = vmatprep.subr.mxu0 0.0
    %195 = vmatpush1.msra.mxu0 0.0
    %196 = vmatprep.subr.mxu0 0.0
    %197 = vmatpush1.msra.mxu0 0.0
    %198 = vmatprep.subr.mxu0 0.0
    %199 = vmatpush1.msra.mxu0 0.0
    %200 = vmatprep.subr.mxu0 0.0
    %201 = vmatpush1.msra.mxu0 0.0
    %202 = vmatprep.subr.mxu0 0.0
    %203 = vmatpush1.msra.mxu0 0.0
    %204 = vmatprep.subr.mxu0 0.0
    %205 = vmatpush1.msra.mxu0 0.0
    %206 = vmatprep.subr.mxu0 0.0
    %207 = vmatpush1.msra.mxu0 0.0
    %208 = vmatprep.subr.mxu0 0.0
    %209 = vmatpush1.msra.mxu0 0.0
    %210 = vmatprep.subr.mxu0 0.0
    %211 = vmatpush1.msra.mxu0 0.0
    %212 = vmatprep.subr.mxu0 0.0
    %213 = vmatpush1.msra.mxu0 0.0
    %214 = vmatprep.subr.mxu0 0.0
    %215 = vmatpush1.msra.mxu0 0.0
    %216 = vmatprep.subr.mxu0 0.0
    %217 = vmatpush1.msra.mxu0 0.0
    %218 = vmatprep.subr.mxu0 0.0
    %219 = vmatpush1.msra.mxu0 0.0
    %220 = vmatprep.subr.mxu0 0.0
    %221 = vmatpush1.msra.mxu0 %v47
    %222 = vmatprep.subr.mxu0 0.0
    %223 = vmatpush2.msra.mxu0 0.0
    %224 = vmatprep.subr.mxu0 0.0
    %225 = vmatpush2.msra.mxu0 0.0
    %226 = vmatprep.subr.mxu0 0.0
    %227 = vmatpush2.msra.mxu0 0.0
    %228 = vmatprep.subr.mxu0 0.0
    %229 = vmatpush2.msra.mxu0 0.0
    %230 = vmatprep.subr.mxu0 0.0
    %231 = vmatpush2.msra.mxu0 0.0
    %232 = vmatprep.subr.mxu0 0.0
    %233 = vmatpush2.msra.mxu0 0.0
    %234 = vmatprep.subr.mxu0 0.0
    %235 = vmatpush2.msra.mxu0 0.0
    %236 = vmatprep.subr.mxu0 0.0
    %237 = vmatpush2.msra.mxu0 0.0
    %238 = vmatprep.subr.mxu0 0.0
    %239 = vmatpush2.msra.mxu0 0.0
    %240 = vmatprep.subr.mxu0 0.0
    %241 = vmatpush2.msra.mxu0 0.0
    %242 = vmatprep.subr.mxu0 0.0
    %243 = vmatpush2.msra.mxu0 0.0
    %244 = vmatprep.subr.mxu0 0.0
    %245 = vmatpush2.msra.mxu0 0.0
    %246 = vmatprep.subr.mxu0 0.0
    %247 = vmatpush2.msra.mxu0 0.0
    %248 = vmatprep.subr.mxu0 0.0
    %249 = vmatpush2.msra.mxu0 0.0
    %250 = vmatprep.subr.mxu0 0.0
    %251 = vmatpush2.msra.mxu0 0.0
    %252 = vmatprep.subr.mxu0 0.0
    %253 = vmatpush2.msra.mxu0 0.0
    %254 = vmatprep.mubr.f32.mxu0 0.0
    %255 = vmatmul.mubr.f32.gmra.mxu0 %v188
    %v256 = vpop.f32.mrf.mxu0
    %v257 = vadd.f32 0.0, %v256
    %v258 = vpop.f32.mrf.mxu0
    %259 = vdwg.mxu0
    %v260 = vmul.f32 %v257, %v183
    %vm261 = vcmask 257024
    %262 = vst.msk [vmem:[#allocation8] sm:$0xf] %vm261, %v260
    %v263 = vld [vmem:[#allocation6] sm:$0xff]
    %264 = vmatprep.subr.mxu0 0.0
    %265 = vmatpush1.msra.mxu0 0.0
    %266 = vmatprep.subr.mxu0 0.0
    %267 = vmatpush1.msra.mxu0 0.0
    %268 = vmatprep.subr.mxu0 0.0
    %269 = vmatpush1.msra.mxu0 0.0
    %270 = vmatprep.subr.mxu0 0.0
    %271 = vmatpush1.msra.mxu0 0.0
    %272 = vmatprep.subr.mxu0 0.0
    %273 = vmatpush1.msra.mxu0 0.0
    %274 = vmatprep.subr.mxu0 0.0
    %275 = vmatpush1.msra.mxu0 0.0
    %276 = vmatprep.subr.mxu0 0.0
    %277 = vmatpush1.msra.mxu0 0.0
    %278 = vmatprep.subr.mxu0 0.0
    %279 = vmatpush1.msra.mxu0 0.0
    %280 = vmatprep.subr.mxu0 0.0
    %281 = vmatpush1.msra.mxu0 0.0
    %282 = vmatprep.subr.mxu0 0.0
    %283 = vmatpush1.msra.mxu0 0.0
    %284 = vmatprep.subr.mxu0 0.0
    %285 = vmatpush1.msra.mxu0 0.0
    %286 = vmatprep.subr.mxu0 0.0
    %287 = vmatpush1.msra.mxu0 0.0
    %288 = vmatprep.subr.mxu0 0.0
    %289 = vmatpush1.msra.mxu0 0.0
    %290 = vmatprep.subr.mxu0 0.0
    %291 = vmatpush1.msra.mxu0 0.0
    %292 = vmatprep.subr.mxu0 0.0
    %293 = vmatpush1.msra.mxu0 0.0
    %294 = vmatprep.subr.mxu0 0.0
    %295 = vmatpush1.msra.mxu0 %v263
    %296 = vmatprep.subr.mxu0 0.0
    %297 = vmatpush2.msra.mxu0 0.0
    %298 = vmatprep.subr.mxu0 0.0
    %299 = vmatpush2.msra.mxu0 0.0
    %300 = vmatprep.subr.mxu0 0.0
    %301 = vmatpush2.msra.mxu0 0.0
    %302 = vmatprep.subr.mxu0 0.0
    %303 = vmatpush2.msra.mxu0 0.0
    %304 = vmatprep.subr.mxu0 0.0
    %305 = vmatpush2.msra.mxu0 0.0
    %306 = vmatprep.subr.mxu0 0.0
    %307 = vmatpush2.msra.mxu0 0.0
    %308 = vmatprep.subr.mxu0 0.0
    %309 = vmatpush2.msra.mxu0 0.0
    %310 = vmatprep.subr.mxu0 0.0
    %311 = vmatpush2.msra.mxu0 0.0
    %312 = vmatprep.subr.mxu0 0.0
    %313 = vmatpush2.msra.mxu0 0.0
    %314 = vmatprep.subr.mxu0 0.0
    %315 = vmatpush2.msra.mxu0 0.0
    %316 = vmatprep.subr.mxu0 0.0
    %317 = vmatpush2.msra.mxu0 0.0
    %318 = vmatprep.subr.mxu0 0.0
    %319 = vmatpush2.msra.mxu0 0.0
    %320 = vmatprep.subr.mxu0 0.0
    %321 = vmatpush2.msra.mxu0 0.0
    %322 = vmatprep.subr.mxu0 0.0
    %323 = vmatpush2.msra.mxu0 0.0
    %324 = vmatprep.subr.mxu0 0.0
    %325 = vmatpush2.msra.mxu0 0.0
    %326 = vmatprep.subr.mxu0 0.0
    %327 = vmatpush2.msra.mxu0 0.0
    %328 = vmatprep.mubr.f32.mxu0 0.0
    %329 = vmatmul.mubr.f32.gmra.mxu0 %v188
    %v330 = vpop.f32.mrf.mxu0
    %v331 = vadd.f32 0.0, %v330
    %v332 = vpop.f32.mrf.mxu0
    %333 = vdwg.mxu0
    %v335 = vsel %vm186, %v331, 0
    %337 = vmatprep.subr.mxu0 0.0
    %338 = vmatpush1.xpose.msra.mxu0 0.0
    %339 = vmatprep.subr.mxu0 0.0
    %340 = vmatpush1.xpose.msra.mxu0 0.0
    %341 = vmatprep.subr.mxu0 0.0
    %342 = vmatpush1.xpose.msra.mxu0 0.0
    %343 = vmatprep.subr.mxu0 0.0
    %344 = vmatpush1.xpose.msra.mxu0 0.0
    %345 = vmatprep.subr.mxu0 0.0
    %346 = vmatpush1.xpose.msra.mxu0 0.0
    %347 = vmatprep.subr.mxu0 0.0
    %348 = vmatpush1.xpose.msra.mxu0 0.0
    %349 = vmatprep.subr.mxu0 0.0
    %350 = vmatpush1.xpose.msra.mxu0 0.0
    %351 = vmatprep.subr.mxu0 0.0
    %352 = vmatpush1.xpose.msra.mxu0 0.0
    %353 = vmatprep.subr.mxu0 0.0
    %354 = vmatpush1.xpose.msra.mxu0 0.0
    %355 = vmatprep.subr.mxu0 0.0
    %356 = vmatpush1.xpose.msra.mxu0 0.0
    %357 = vmatprep.subr.mxu0 0.0
    %358 = vmatpush1.xpose.msra.mxu0 0.0
    %359 = vmatprep.subr.mxu0 0.0
    %360 = vmatpush1.xpose.msra.mxu0 0.0
    %361 = vmatprep.subr.mxu0 0.0
    %362 = vmatpush1.xpose.msra.mxu0 0.0
    %363 = vmatprep.subr.mxu0 0.0
    %364 = vmatpush1.xpose.msra.mxu0 0.0
    %365 = vmatprep.subr.mxu0 0.0
    %366 = vmatpush1.xpose.msra.mxu0 0.0
    %367 = vmatprep.subr.mxu0 0.0
    %368 = vmatpush1.xpose.msra.mxu0 %v188
    %369 = vmatprep.subr.mxu0 0.0
    %370 = vmatpush2.xpose.msra.mxu0 0.0
    %371 = vmatprep.subr.mxu0 0.0
    %372 = vmatpush2.xpose.msra.mxu0 0.0
    %373 = vmatprep.subr.mxu0 0.0
    %374 = vmatpush2.xpose.msra.mxu0 0.0
    %375 = vmatprep.subr.mxu0 0.0
    %376 = vmatpush2.xpose.msra.mxu0 0.0
    %377 = vmatprep.subr.mxu0 0.0
    %378 = vmatpush2.xpose.msra.mxu0 0.0
    %379 = vmatprep.subr.mxu0 0.0
    %380 = vmatpush2.xpose.msra.mxu0 0.0
    %381 = vmatprep.subr.mxu0 0.0
    %382 = vmatpush2.xpose.msra.mxu0 0.0
    %383 = vmatprep.subr.mxu0 0.0
    %384 = vmatpush2.xpose.msra.mxu0 0.0
    %385 = vmatprep.subr.mxu0 0.0
    %386 = vmatpush2.xpose.msra.mxu0 0.0
    %387 = vmatprep.subr.mxu0 0.0
    %388 = vmatpush2.xpose.msra.mxu0 0.0
    %389 = vmatprep.subr.mxu0 0.0
    %390 = vmatpush2.xpose.msra.mxu0 0.0
    %391 = vmatprep.subr.mxu0 0.0
    %392 = vmatpush2.xpose.msra.mxu0 0.0
    %393 = vmatprep.subr.mxu0 0.0
    %394 = vmatpush2.xpose.msra.mxu0 0.0
    %395 = vmatprep.subr.mxu0 0.0
    %396 = vmatpush2.xpose.msra.mxu0 0.0
    %397 = vmatprep.subr.mxu0 0.0
    %398 = vmatpush2.xpose.msra.mxu0 0.0
    %399 = vmatprep.subr.mxu0 0.0
    %400 = vmatpush2.xpose.msra.mxu0 0.0
    %401 = vmatprep.mubr.f32.mxu0 0.0
    %402 = vmatmul.mubr.f32.gmra.mxu0 %v335
    %v403 = vpop.f32.mrf.mxu0
    %v404 = vadd.f32 0.0, %v403
    %v405 = vpop.f32.mrf.mxu0
    %406 = vdwg.mxu0
    %vm407 = vcmask 27648
    %408 = vst.msk [vmem:[#allocation9] sm:$0xf] %vm407, %v404
    %vm409 = vcmask 24576
    %410 = vst.msk [vmem:[#allocation11] sm:$0x1] %vm409, %v176
    // Predicated region
    $region26: #{gpool.1} parent=1 // pred_check
      _
    $region27: #{gpool.1} parent=1 // pred_check_branch
      %412 = sbr.rel (0) target = $region29
    $region28: #{gpool.1} parent=1 // pred_region
      %s414 = ssub.s32 64, 64
      %415 = vsyncadd [#allocation5], %s414
      %s417 = sshll.u32 [#allocation8], 4
      %s418 = int_to_ptr.vmem [resolvable:$true] %s417
      %420 = dma.vmem_to_hbm [thread:$0]  %s418, 64, %s4, [#allocation5]
    $region29: #{gpool.1} parent=1 // pred_fallthru
      _
    // Predicated region
    $region30: #{gpool.1} parent=1 // pred_check
      _
    $region31: #{gpool.1} parent=1 // pred_check_branch
      %422 = sbr.rel (0) target = $region33
    $region32: #{gpool.1} parent=1 // pred_region
      %s424 = ssub.s32 64, 64
      %425 = vsyncadd [#allocation10], %s424
      %s427 = sshll.u32 [#allocation9], 4
      %s428 = int_to_ptr.vmem [resolvable:$true] %s427
      %430 = dma.vmem_to_hbm [thread:$0]  %s428, 64, %s5, [#allocation10]
    $region33: #{gpool.1} parent=1 // pred_fallthru
      _
    // Predicated region
    $region34: #{gpool.1} parent=1 // pred_check
      _
    $region35: #{gpool.1} parent=1 // pred_check_branch
      %432 = sbr.rel (0) target = $region37
    $region36: #{gpool.1} parent=1 // pred_region
      %s434 = ssub.s32 16, 16
      %435 = vsyncadd [#allocation10], %s434
      %s437 = sshll.u32 [#allocation11], 4
      %s438 = int_to_ptr.vmem [resolvable:$true] %s437
      %440 = dma.vmem_to_hbm [thread:$0]  %s438, 16, %s6, [#allocation10]
    $region37: #{gpool.1} parent=1 // pred_fallthru
      _
    // Predicated region
    $region38: #{gpool.1} parent=1 // pred_check
      _
    $region39: #{gpool.1} parent=1 // pred_check_branch
      %442 = sbr.rel (0) target = $region41
    $region40: #{gpool.1} parent=1 // pred_region
      %443 = dma.done [#allocation5], 64
    $region41: #{gpool.1} parent=1 // pred_fallthru
      _
    // Predicated region
    $region42: #{gpool.1} parent=1 // pred_check
      _
    $region43: #{gpool.1} parent=1 // pred_check_branch
      %445 = sbr.rel (0) target = $region45
    $region44: #{gpool.1} parent=1 // pred_region
      %446 = dma.done [#allocation10], 64
    $region45: #{gpool.1} parent=1 // pred_fallthru
      _
    // Predicated region
    $region46: #{gpool.1} parent=1 // pred_check
      _
    $region47: #{gpool.1} parent=1 // pred_check_branch
      %448 = sbr.rel (0) target = $region49
    $region48: #{gpool.1} parent=1 // pred_region
      %449 = dma.done [#allocation10], 16
    $region49: #{gpool.1} parent=1 // pred_fallthru
      _
    %450 = vsyncpa [#allocation4], 1
    %451 = vsyncpa [#allocation7], 1
    %452 = vsyncpa [#allocation5], 1
    %453 = vsyncpa [#allocation10], 1

</llo_original>
